<compile_context>
chip_gen: v7x
topology: tpu7x:2x2x1
jax: 0.10.0
libtpu: 0.0.40
codegen_flags: <defaults>
</compile_context>

<pallas_src>
import functools
import math

import jax
import jax.numpy as jnp
from jax.experimental import pallas as pl
from jax.experimental.pallas import tpu as pltpu


# --------------------------------------------------------------------------- #
# Activation (f32, VPU/EUP), matching PyTorch defaults.
# --------------------------------------------------------------------------- #
def _apply_activation(y, activation):
    if activation is None:
        return y
    if activation == "relu":
        return jnp.maximum(y, 0.0)
    if activation == "relu6":
        return jnp.clip(y, 0.0, 6.0)
    if activation == "leaky_relu":
        return jnp.where(y >= 0.0, y, 0.01 * y)              # default slope 0.01
    if activation == "elu":
        return jnp.where(y > 0.0, y, jnp.expm1(y))            # alpha = 1.0
    if activation == "selu":
        alpha = 1.6732632423543772848170429916717
        scale = 1.0507009873554804934193349852946
        return scale * jnp.where(y > 0.0, y, alpha * jnp.expm1(y))
    if activation == "celu":
        return jnp.where(y > 0.0, y, jnp.expm1(y))            # alpha = 1.0
    raise ValueError(f"unknown activation: {activation}")


# --------------------------------------------------------------------------- #
# Kernel
# --------------------------------------------------------------------------- #
def _linear_kernel(x_ref, w_ref, b_ref, o_ref, acc_ref, *,
                   activation, cast_to_bf16, precision):
    # x_ref: (tm, tk), w_ref: (tk, tn)  [pre-transposed], b_ref: (1, tn),
    # o_ref: (tm, tn), acc_ref: (tm, tn) f32 accumulator.
    k = pl.program_id(2)

    @pl.when(k == 0)
    def _():
        # Fold the bias into the accumulator init: removes one full (tm, tn)
        # VPU add + bias read from the epilogue (v5e has only 1 store slot).
        acc_ref[...] = b_ref[...].astype(jnp.float32) + jnp.zeros_like(acc_ref)

    a = x_ref[...]
    w = w_ref[...]
    if cast_to_bf16:
        a = a.astype(jnp.bfloat16)
        w = w.astype(jnp.bfloat16)

    # Canonical (M,K) x (K,N) contraction -> direct MXU lowering, no per-step
    # XLU transpose of the weight tile.
    acc_ref[...] += jnp.dot(a, w, preferred_element_type=jnp.float32,
                            precision=precision)

    @pl.when(k == pl.num_programs(2) - 1)
    def _():
        o_ref[...] = _apply_activation(acc_ref[...], activation).astype(o_ref.dtype)


# --------------------------------------------------------------------------- #
# Tiling helpers
# --------------------------------------------------------------------------- #
def _cdiv(a, b):
    return (a + b - 1) // b


def _round_up(x, m):
    return _cdiv(x, m) * m


def _balanced_tile(dim, unit, cap):
    """Smallest uniform tile (multiple of `unit`, <= cap) that splits `dim`
    into the minimum number of tiles -> avoids near-2x padding blowups."""
    units = _cdiv(dim, unit)
    cap_units = max(cap // unit, 1)
    n_tiles = _cdiv(units, cap_units)
    return unit * _cdiv(units, n_tiles)


def _vmem_needed(tm, tn, tk, in_bytes, out_bytes):
    return (2 * (tm * tk + tk * tn) * in_bytes   # double-buffered x / w tiles
            + 2 * tn * 4                         # double-buffered bias tile
            + 2 * tm * tn * out_bytes            # double-buffered output tile
            + tm * tn * 4)                       # f32 accumulator scratch


def _vmem_budget_bytes():
    """Generation-aware scoped-VMEM budget: ~3/4 of physical VMEM
    (~48 MiB on v7x's 64 MiB/TC, ~96 MiB on v5e/v6e's 128 MiB)."""
    try:
        cap = int(pltpu.get_tpu_info().vmem_capacity_bytes)
    except Exception:
        cap = 64 * 2**20     # conservative fallback (v7x per-TC)
    return (cap * 3) // 4


# --------------------------------------------------------------------------- #
# Wrapper
# --------------------------------------------------------------------------- #
def linear_layer(x, weight, bias, activation=None, *,
                 tm_max=512, tn_max=1024, tk_max=2048,
                 cast_to_bf16=False, precision=None):
    """Pallas equivalent of LinearLayer.forward.

    x:      (..., in_feats)
    weight: (out_feats, in_feats)  -- PyTorch layout; transposed once here.
    bias:   (out_feats,)
    """
    orig_shape = x.shape
    K = orig_shape[-1]
    x2 = x.reshape(-1, K)
    M = x2.shape[0]
    N, K2 = weight.shape
    assert K == K2, f"in_feats mismatch: {K} vs {K2}"

    # ---- tile selection: balanced splits, budget-aware, megacore-aware ---- #
    tm = _balanced_tile(M, 8, tm_max)
    tn = _balanced_tile(N, 128, tn_max)
    tk = _balanced_tile(K, 128, tk_max)

    in_bytes = x2.dtype.itemsize
    out_bytes = x.dtype.itemsize
    vmem_budget = _vmem_budget_bytes()
    while _vmem_needed(tm, tn, tk, in_bytes, out_bytes) > vmem_budget:
        if tk > 128:
            tk = 128 * _cdiv(tk // 128, 2)
        elif tn > 128:
            tn = 128 * _cdiv(tn // 128, 2)
        elif tm > 8:
            tm = 8 * _cdiv(tm // 8, 2)
        else:
            break

    Mp, Np, Kp = _round_up(M, tm), _round_up(N, tn), _round_up(K, tk)

    # v7x has 2 TensorCores: make sure the product of the parallel grid axes
    # is >= 2 when the problem allows it (otherwise one core sits idle).
    if Mp // tm == 1 and Np // tn == 1:
        if Np // 128 >= 2:
            tn = 128 * _cdiv(Np // 128, 2)
            Np = _round_up(N, tn)
        elif Mp // 8 >= 2:
            tm = 8 * _cdiv(Mp // 8, 2)
            Mp = _round_up(M, tm)

    # ---- pre-transpose weight once (K, N) + zero-pad to tile multiples ---- #
    wt = weight.T                                   # (K, N), amortized / cacheable
    if (Mp, Kp) != (M, K):
        x2 = jnp.pad(x2, ((0, Mp - M), (0, Kp - K)))
    if (Kp, Np) != (K, N):
        wt = jnp.pad(wt, ((0, Kp - K), (0, Np - N)))
    b = bias if Np == N else jnp.pad(bias, (0, Np - N))
    b2 = b.reshape(1, Np)

    grid = (Mp // tm, Np // tn, Kp // tk)

    transcendentals = M * N if activation in ("elu", "selu", "celu") else 0
    cost = pl.CostEstimate(
        flops=2 * Mp * Np * Kp,
        transcendentals=transcendentals,
        bytes_accessed=(Mp * Kp + Kp * Np) * in_bytes + Np * 4
                       + Mp * Np * out_bytes)

    kernel = functools.partial(_linear_kernel, activation=activation,
                               cast_to_bf16=cast_to_bf16, precision=precision)

    out = pl.pallas_call(
        kernel,
        out_shape=jax.ShapeDtypeStruct((Mp, Np), x.dtype),
        grid_spec=pltpu.PrefetchScalarGridSpec(
            num_scalar_prefetch=0,
            grid=grid,
            in_specs=[
                pl.BlockSpec((tm, tk), lambda i, j, k: (i, k)),   # x tile
                pl.BlockSpec((tk, tn), lambda i, j, k: (k, j)),   # weight (K,N) tile
                pl.BlockSpec((1, tn), lambda i, j, k: (0, j)),    # bias tile
            ],
            out_specs=pl.BlockSpec((tm, tn), lambda i, j, k: (i, j)),
            scratch_shapes=[pltpu.VMEM((tm, tn), jnp.float32)],
        ),
        compiler_params=pltpu.CompilerParams(
            dimension_semantics=("parallel", "parallel", "arbitrary"),
            vmem_limit_bytes=int(vmem_budget)),
        cost_estimate=cost,
    )(x2, wt, b2)

    if (Mp, Np) != (M, N):
        out = out[:M, :N]
    return out.reshape(*orig_shape[:-1], N)


def init_linear_params(key, in_feats, out_feats):
    """Deterministic nn.Linear-style init: U(-1/sqrt(in), 1/sqrt(in))."""
    kw, kb = jax.random.split(key)
    bound = 1.0 / math.sqrt(in_feats)
    weight = jax.random.uniform(kw, (out_feats, in_feats), jnp.float32,
                                minval=-bound, maxval=bound)
    bias = jax.random.uniform(kb, (out_feats,), jnp.float32,
                              minval=-bound, maxval=bound)
    return weight, bias


if __name__ == "__main__":
    # --- primary check: module-sized shapes, relu ----------------------------
    batch, in_feats, out_feats = 8, 32, 64
    activation = "relu"

    key = jax.random.PRNGKey(0)
    kx, kp = jax.random.split(key)
    x = jax.random.normal(kx, (batch, in_feats), jnp.float32)
    weight, bias = init_linear_params(kp, in_feats, out_feats)

    out = jax.block_until_ready(linear_layer(x, weight, bias, activation=activation))
    ref = jnp.maximum(x @ weight.T + bias, 0.0)
    assert out.shape == (batch, out_feats)
    assert jnp.allclose(out, ref, atol=1e-4, rtol=1e-4), "relu mismatch vs reference"

    # --- secondary check: 3-D input, unaligned shapes, multi-tile K/N, elu ---
    B2, S2, K2, N2 = 2, 10, 160, 200
    k1, k2, k3 = jax.random.split(jax.random.PRNGKey(0), 3)
    x2 = jax.random.normal(k1, (B2, S2, K2), jnp.float32)
    w2 = jax.random.uniform(k2, (N2, K2), jnp.float32, minval=-0.1, maxval=0.1)
    b2 = jax.random.uniform(k3, (N2,), jnp.float32, minval=-0.1, maxval=0.1)
    out2 = jax.block_until_ready(
        linear_layer(x2, w2, b2, activation="elu", tn_max=128, tk_max=128))
    y2 = jnp.einsum("bsk,nk->bsn", x2, w2) + b2
    ref2 = jnp.where(y2 > 0, y2, jnp.expm1(y2))
    assert out2.shape == (B2, S2, N2)
    assert jnp.allclose(out2, ref2, atol=1e-4, rtol=1e-4), "elu mismatch vs reference"

    print("KERNEL_OK")
</pallas_src>

<mosaic_0001>
module attributes {stable_mosaic.version = 11 : i64} {
  func.func @_linear_kernel(%arg0: i32, %arg1: i32, %arg2: i32, %arg3: memref<8x128xf32, #tpu.memory_space<vmem>>, %arg4: memref<128x128xf32, #tpu.memory_space<vmem>>, %arg5: memref<1x128xf32, #tpu.memory_space<vmem>>, %arg6: memref<8x128xf32, #tpu.memory_space<vmem>>, %arg7: memref<8x128xf32, #tpu.memory_space<vmem>>) attributes {dimension_semantics = [#tpu.dimension_semantics<parallel>, #tpu.dimension_semantics<parallel>, #tpu.dimension_semantics<arbitrary>], iteration_bounds = array<i64: 1, 1, 1>, scalar_prefetch = 0 : i64, scratch_operands = 1 : i64, tpu.core_type = #tpu.core_type<tc>, window_params = [{transform_indices = @transform_0, window_bounds = array<i64: 8, 128>}, {transform_indices = @transform_1, window_bounds = array<i64: 128, 128>}, {transform_indices = @transform_2, window_bounds = array<i64: 1, 128>}, {transform_indices = @transform_3, window_bounds = array<i64: 8, 128>}]} {
    %c0_i32 = arith.constant 0 : i32
    %0 = arith.cmpi eq, %arg2, %c0_i32 : i32
    %1 = arith.extui %0 : i1 to i32
    %c0_i32_0 = arith.constant 0 : i32
    %2 = arith.cmpi ne, %1, %c0_i32_0 : i32
    scf.if %2 {
      %c0_10 = arith.constant 0 : index
      %c0_11 = arith.constant 0 : index
      %12 = vector.load %arg5[%c0_10, %c0_11] : memref<1x128xf32, #tpu.memory_space<vmem>>, vector<1x128xf32>
      %cst_12 = arith.constant 0.000000e+00 : f32
      %13 = vector.broadcast %cst_12 : f32 to vector<8x128xf32>
      %14 = vector.broadcast %12 : vector<1x128xf32> to vector<8x128xf32>
      %15 = arith.addf %14, %13 : vector<8x128xf32>
      %c0_13 = arith.constant 0 : index
      %c0_14 = arith.constant 0 : index
      %16 = vector.load %arg7[%c0_13, %c0_14] : memref<8x128xf32, #tpu.memory_space<vmem>>, vector<8x128xf32>
      tpu.vector_store %arg7[%c0_13, %c0_14], %15 {strides = array<i32>} : memref<8x128xf32, #tpu.memory_space<vmem>>, vector<8x128xf32>,
    } else {
    }
    %c0 = arith.constant 0 : index
    %c0_1 = arith.constant 0 : index
    %3 = vector.load %arg3[%c0, %c0_1] : memref<8x128xf32, #tpu.memory_space<vmem>>, vector<8x128xf32>
    %c0_2 = arith.constant 0 : index
    %c0_3 = arith.constant 0 : index
    %4 = vector.load %arg4[%c0_2, %c0_3] : memref<128x128xf32, #tpu.memory_space<vmem>>, vector<128x128xf32>
    %c0_4 = arith.constant 0 : index
    %c0_5 = arith.constant 0 : index
    %5 = vector.load %arg7[%c0_4, %c0_5] : memref<8x128xf32, #tpu.memory_space<vmem>>, vector<8x128xf32>
    %cst = arith.constant dense<0.000000e+00> : vector<8x128xf32>
    %6 = tpu.matmul %3, %4, %cst {dimension_numbers = #tpu.dot_dimension_numbers<[1], [0], [0], [1], [0, 0, 1, 1], [], []>} : vector<8x128xf32>, vector<128x128xf32>, vector<8x128xf32> -> vector<8x128xf32>
    %7 = arith.addf %5, %6 : vector<8x128xf32>
    %c0_6 = arith.constant 0 : index
    %c0_7 = arith.constant 0 : index
    %8 = vector.load %arg7[%c0_6, %c0_7] : memref<8x128xf32, #tpu.memory_space<vmem>>, vector<8x128xf32>
    tpu.vector_store %arg7[%c0_6, %c0_7], %7 {strides = array<i32>} : memref<8x128xf32, #tpu.memory_space<vmem>>, vector<8x128xf32>,
    %c0_i32_8 = arith.constant 0 : i32
    %9 = arith.cmpi eq, %arg2, %c0_i32_8 : i32
    %10 = arith.extui %9 : i1 to i32
    %c0_i32_9 = arith.constant 0 : i32
    %11 = arith.cmpi ne, %10, %c0_i32_9 : i32
    scf.if %11 {
      %c0_10 = arith.constant 0 : index
      %c0_11 = arith.constant 0 : index
      %12 = vector.load %arg7[%c0_10, %c0_11] : memref<8x128xf32, #tpu.memory_space<vmem>>, vector<8x128xf32>
      %cst_12 = arith.constant 0.000000e+00 : f32
      %13 = vector.broadcast %cst_12 : f32 to vector<8x128xf32>
      %14 = arith.maximumf %12, %13 : vector<8x128xf32>
      %c0_13 = arith.constant 0 : index
      %c0_14 = arith.constant 0 : index
      %15 = vector.load %arg6[%c0_13, %c0_14] : memref<8x128xf32, #tpu.memory_space<vmem>>, vector<8x128xf32>
      tpu.vector_store %arg6[%c0_13, %c0_14], %14 {strides = array<i32>} : memref<8x128xf32, #tpu.memory_space<vmem>>, vector<8x128xf32>,
    } else {
    }
    return
  }
  func.func @transform_0(%arg0: i32, %arg1: i32, %arg2: i32) -> (i32, i32) {
    %c0_i32 = arith.constant 0 : i32
    return %arg0, %arg2 : i32, i32
  }
  func.func @transform_1(%arg0: i32, %arg1: i32, %arg2: i32) -> (i32, i32) {
    %c0_i32 = arith.constant 0 : i32
    return %arg2, %arg1 : i32, i32
  }
  func.func @transform_2(%arg0: i32, %arg1: i32, %arg2: i32) -> (i32, i32) {
    %c0_i32 = arith.constant 0 : i32
    %c0_i32_0 = arith.constant 0 : i32
    return %c0_i32, %arg1 : i32, i32
  }
  func.func @transform_3(%arg0: i32, %arg1: i32, %arg2: i32) -> (i32, i32) {
    %c0_i32 = arith.constant 0 : i32
    return %arg0, %arg1 : i32, i32
  }
}

</mosaic_0001>

<llo_original>
// kernel: tpu_custom_call.1
$region0: #{tpu_custom_call.1}
  #allocation0 [shape = 'u32[]', space=smem, size = 0x4, offset = 0x4, fixed_abs, tag = 'smem constant byte address 0x4 - core index']
  #allocation1 [shape = 'u32[144,128]{1,0:T(1,128)}', space=vmem, size = 0x12000, scoped, tag = 'internal scratch']
  #allocation2 [shape = 'f32[8,128]{1,0:T(8,128)}', space=vmem, size = 0x1000, scoped, tag = 'scratch operand']
  %s0 = inlined_call_operand.hbm [shape: f32[8,128], index: 0, kind: input, shape index: {}]
  %s1 = inlined_call_operand.hbm [shape: f32[128,128], index: 1, kind: input, shape index: {}]
  %s2 = inlined_call_operand.vmem [shape: f32[1,128], index: 2, kind: input, shape index: {}]
  %s3 = inlined_call_operand.hbm [shape: f32[8,128], index: 3, kind: output, shape index: {}]
  %s4 = sld [smem:[#allocation0]]
  $region38: #{tpu_custom_call.1} parent=0
    _
  %s6 = ssub.s32 1, %s4
  %s7 = scalar_select 0, %s6, %s4
  $region1: #{tpu_custom_call.1} parent=0
    #allocation3 [shape = 'u8[4096]{0}', space=vmem, size = 0x1000, scoped, tag = 'input window, operand 0, single buffered']
    #allocation4 [shape = 's32[1]{0}', space=sflag, size = 0x4, scoped, tag = 'scoped memory for tpu_custom_call.1']
    #allocation5 [shape = 's32[1]{0}', space=sflag, size = 0x4, scoped, tag = 'scoped memory for tpu_custom_call.1']
    #allocation6 [shape = 'u8[65536]{0}', space=vmem, size = 0x10000, scoped, tag = 'input window, operand 1, single buffered']
    #allocation7 [shape = 's32[1]{0}', space=sflag, size = 0x4, scoped, tag = 'scoped memory for tpu_custom_call.1']
    #allocation8 [shape = 'u8[4096]{0}', space=vmem, size = 0x1000, scoped, tag = 'output window, operand 0, single buffered']
    %8 = vsyncpa [#allocation4], 0
    %9 = vsyncpa [#allocation7], 0
    %10 = vsyncpa [#allocation5], 0
    // Predicated region
    $region2: #{tpu_custom_call.1} parent=1 // pred_check
      _
    $region3: #{tpu_custom_call.1} parent=1 // pred_check_branch
      %12 = sbr.rel (0) target = $region5
    $region4: #{tpu_custom_call.1} parent=1 // pred_region
      %s14 = ssub.s32 128, 128
      %15 = vsyncadd [#allocation4], %s14
      %s17 = sshll.u32 [#allocation3], 4
      %s18 = int_to_ptr.vmem [resolvable:$true] %s17
      %20 = dma.hbm_to_vmem [thread:$0]  %s0, 128, %s18, [#allocation4]
    $region5: #{tpu_custom_call.1} parent=1 // pred_fallthru
      _
    // Predicated region
    $region6: #{tpu_custom_call.1} parent=1 // pred_check
      _
    $region7: #{tpu_custom_call.1} parent=1 // pred_check_branch
      %22 = sbr.rel (0) target = $region9
    $region8: #{tpu_custom_call.1} parent=1 // pred_region
      %s24 = ssub.s32 2048, 2048
      %25 = vsyncadd [#allocation7], %s24
      %s26 = sshll.u32 [#allocation6], 4
      %s27 = int_to_ptr.vmem [resolvable:$true] %s26
      %32 = dma.hbm_to_vmem [thread:$0]  %s1, 2048, %s27, [#allocation7], 128, 128, 8
    $region9: #{tpu_custom_call.1} parent=1 // pred_fallthru
      _
    // Predicated region
    $region10: #{tpu_custom_call.1} parent=1 // pred_check
      _
    $region11: #{tpu_custom_call.1} parent=1 // pred_check_branch
      %34 = sbr.rel (0) target = $region13
    $region12: #{tpu_custom_call.1} parent=1 // pred_region
      _
    $region13: #{tpu_custom_call.1} parent=1 // pred_fallthru
      _
    // Predicated region
    $region14: #{tpu_custom_call.1} parent=1 // pred_check
      _
    $region15: #{tpu_custom_call.1} parent=1 // pred_check_branch
      %36 = sbr.rel (0) target = $region17
    $region16: #{tpu_custom_call.1} parent=1 // pred_region
      %37 = dma.done [#allocation4], 128
    $region17: #{tpu_custom_call.1} parent=1 // pred_fallthru
      _
    // Predicated region
    $region18: #{tpu_custom_call.1} parent=1 // pred_check
      _
    $region19: #{tpu_custom_call.1} parent=1 // pred_check_branch
      %39 = sbr.rel (0) target = $region21
    $region20: #{tpu_custom_call.1} parent=1 // pred_region
      %40 = dma.done [#allocation7], 2048
    $region21: #{tpu_custom_call.1} parent=1 // pred_fallthru
      _
    %p41 = scmp.eq.s32.totalorder 0, 0
    // Predicated region
    $region22: #{tpu_custom_call.1} parent=1 // pred_check
      %p42 = pneg %p41
    $region23: #{tpu_custom_call.1} parent=1 // pred_check_branch
      %44 = sbr.rel (%p42) target = $region25
    $region24: #{tpu_custom_call.1} parent=1 // pred_region
      %v45 = vld [vmem:[%s2] sm:$0x1]
      %v47 = vlaneseq
      %v48 = vshrl.u32 %v47, 7
      %v49 = vsub.s32 0, %v48
      %v50 = vrot.slane %v45, %v49
      %v52 = vadd.f32 %v50, 0.0
      %53 = vst [vmem:[#allocation2] sm:$0xff] %v52
    $region25: #{tpu_custom_call.1} parent=1 // pred_fallthru
      _
    %v54 = vld [vmem:[#allocation3] sm:$0xff]
    %v55 = vld [vmem:[#allocation6] sm:$0xff]
    %v56 = vld [vmem:[#allocation6 + $0x8] sm:$0xff]
    %v57 = vld [vmem:[#allocation6 + $0x10] sm:$0xff]
    %v58 = vld [vmem:[#allocation6 + $0x18] sm:$0xff]
    %v59 = vld [vmem:[#allocation6 + $0x20] sm:$0xff]
    %v60 = vld [vmem:[#allocation6 + $0x28] sm:$0xff]
    %v61 = vld [vmem:[#allocation6 + $0x30] sm:$0xff]
    %v62 = vld [vmem:[#allocation6 + $0x38] sm:$0xff]
    %v63 = vld [vmem:[#allocation6 + $0x40] sm:$0xff]
    %v64 = vld [vmem:[#allocation6 + $0x48] sm:$0xff]
    %v65 = vld [vmem:[#allocation6 + $0x50] sm:$0xff]
    %v66 = vld [vmem:[#allocation6 + $0x58] sm:$0xff]
    %v67 = vld [vmem:[#allocation6 + $0x60] sm:$0xff]
    %v68 = vld [vmem:[#allocation6 + $0x68] sm:$0xff]
    %v69 = vld [vmem:[#allocation6 + $0x70] sm:$0xff]
    %v70 = vld [vmem:[#allocation6 + $0x78] sm:$0xff]
    %v71 = vld [vmem:[#allocation2] sm:$0xff]
    %72 = vmatprep.subr.mxu0 0.0
    %73 = vmatpush1.msra.mxu0 %v55
    %74 = vmatprep.subr.mxu0 0.0
    %75 = vmatpush1.msra.mxu0 %v56
    %76 = vmatprep.subr.mxu0 0.0
    %77 = vmatpush1.msra.mxu0 %v57
    %78 = vmatprep.subr.mxu0 0.0
    %79 = vmatpush1.msra.mxu0 %v58
    %80 = vmatprep.subr.mxu0 0.0
    %81 = vmatpush1.msra.mxu0 %v59
    %82 = vmatprep.subr.mxu0 0.0
    %83 = vmatpush1.msra.mxu0 %v60
    %84 = vmatprep.subr.mxu0 0.0
    %85 = vmatpush1.msra.mxu0 %v61
    %86 = vmatprep.subr.mxu0 0.0
    %87 = vmatpush1.msra.mxu0 %v62
    %88 = vmatprep.subr.mxu0 0.0
    %89 = vmatpush1.msra.mxu0 %v63
    %90 = vmatprep.subr.mxu0 0.0
    %91 = vmatpush1.msra.mxu0 %v64
    %92 = vmatprep.subr.mxu0 0.0
    %93 = vmatpush1.msra.mxu0 %v65
    %94 = vmatprep.subr.mxu0 0.0
    %95 = vmatpush1.msra.mxu0 %v66
    %96 = vmatprep.subr.mxu0 0.0
    %97 = vmatpush1.msra.mxu0 %v67
    %98 = vmatprep.subr.mxu0 0.0
    %99 = vmatpush1.msra.mxu0 %v68
    %100 = vmatprep.subr.mxu0 0.0
    %101 = vmatpush1.msra.mxu0 %v69
    %102 = vmatprep.subr.mxu0 0.0
    %103 = vmatpush1.msra.mxu0 %v70
    %104 = vmatprep.subr.mxu0 0.0
    %105 = vmatpush1.msra.mxu0 0.0
    %106 = vmatprep.subr.mxu0 0.0
    %107 = vmatpush1.msra.mxu0 0.0
    %108 = vmatprep.subr.mxu0 0.0
    %109 = vmatpush1.msra.mxu0 0.0
    %110 = vmatprep.subr.mxu0 0.0
    %111 = vmatpush1.msra.mxu0 0.0
    %112 = vmatprep.subr.mxu0 0.0
    %113 = vmatpush1.msra.mxu0 0.0
    %114 = vmatprep.subr.mxu0 0.0
    %115 = vmatpush1.msra.mxu0 0.0
    %116 = vmatprep.subr.mxu0 0.0
    %117 = vmatpush1.msra.mxu0 0.0
    %118 = vmatprep.subr.mxu0 0.0
    %119 = vmatpush1.msra.mxu0 0.0
    %120 = vmatprep.subr.mxu0 0.0
    %121 = vmatpush1.msra.mxu0 0.0
    %122 = vmatprep.subr.mxu0 0.0
    %123 = vmatpush1.msra.mxu0 0.0
    %124 = vmatprep.subr.mxu0 0.0
    %125 = vmatpush1.msra.mxu0 0.0
    %126 = vmatprep.subr.mxu0 0.0
    %127 = vmatpush1.msra.mxu0 0.0
    %128 = vmatprep.subr.mxu0 0.0
    %129 = vmatpush1.msra.mxu0 0.0
    %130 = vmatprep.subr.mxu0 0.0
    %131 = vmatpush1.msra.mxu0 0.0
    %132 = vmatprep.subr.mxu0 0.0
    %133 = vmatpush1.msra.mxu0 0.0
    %134 = vmatprep.subr.mxu0 0.0
    %135 = vmatpush1.msra.mxu0 0.0
    %136 = vmatprep.mubr.f32.mxu0 0.0
    %137 = vmatmul.mubr.f32.gmra.mrb[0].mxu0 %v54
    %v138 = vpop.f32.mrb[0].mxu0
    %v139 = vadd.f32 0.0, %v138
    %v140 = vpop.f32.mrb[0].mxu0
    %141 = vdwg.mxu0
    %v142 = vadd.f32 %v71, %v139
    %143 = vst [vmem:[#allocation2] sm:$0xff] %v142
    // Predicated region
    $region26: #{tpu_custom_call.1} parent=1 // pred_check
      %p144 = pneg %p41
    $region27: #{tpu_custom_call.1} parent=1 // pred_check_branch
      %146 = sbr.rel (%p144) target = $region29
    $region28: #{tpu_custom_call.1} parent=1 // pred_region
      %v147 = vld [vmem:[#allocation2] sm:$0xff]
      %v148 = vmax.f32 %v147, 0.0
      %149 = vst [vmem:[#allocation8] sm:$0xff] %v148
    $region29: #{tpu_custom_call.1} parent=1 // pred_fallthru
      _
    // Predicated region
    $region30: #{tpu_custom_call.1} parent=1 // pred_check
      _
    $region31: #{tpu_custom_call.1} parent=1 // pred_check_branch
      %151 = sbr.rel (0) target = $region33
    $region32: #{tpu_custom_call.1} parent=1 // pred_region
      %s153 = ssub.s32 128, 128
      %154 = vsyncadd [#allocation5], %s153
      %s156 = sshll.u32 [#allocation8], 4
      %s157 = int_to_ptr.vmem [resolvable:$true] %s156
      %159 = dma.vmem_to_hbm [thread:$0]  %s157, 128, %s3, [#allocation5]
    $region33: #{tpu_custom_call.1} parent=1 // pred_fallthru
      _
    // Predicated region
    $region34: #{tpu_custom_call.1} parent=1 // pred_check
      _
    $region35: #{tpu_custom_call.1} parent=1 // pred_check_branch
      %161 = sbr.rel (0) target = $region37
    $region36: #{tpu_custom_call.1} parent=1 // pred_region
      %162 = dma.done [#allocation5], 128
    $region37: #{tpu_custom_call.1} parent=1 // pred_fallthru
      _
    %163 = vsyncpa [#allocation4], 1
    %164 = vsyncpa [#allocation7], 1
    %165 = vsyncpa [#allocation5], 1

</llo_original>
